<compile_context>
chip_gen: v5e
topology: v5e:2x2
jax: 0.10.0
libtpu: 0.0.40
codegen_flags: <defaults>
</compile_context>

<pallas_src>
import jax
import jax.numpy as jnp
import numpy as np
from jax.experimental import pallas as pl
from jax.experimental.pallas import tpu as pltpu


def _round_up(x, m):
    return ((x + m - 1) // m) * m


def _pixel_shuffle(image_features, d):
    # Exact port of Cohere2VisionMultiModalProjector.pixel_shuffle
    b, s, f = image_features.shape
    h = w = int(s ** 0.5)
    x = image_features.reshape(b, w, h, f)
    x = x.reshape(b, w, h // d, f * d)
    x = jnp.transpose(x, (0, 2, 1, 3))
    x = x.reshape(b, h // d, w // d, f * d * d)
    x = jnp.transpose(x, (0, 2, 1, 3))           # (b, w//d, h//d, f*d*d)
    return x


def _projector_kernel(x_ref, w1x_ref, w1g_ref, b1x_ref, b1g_ref, w2_ref, b2_ref,
                      out_ref, acc_ref):
    # Grid: (token tiles i, intermediate-half tiles k).  k is a reduction axis.
    k = pl.program_id(1)

    @pl.when(k == 0)
    def _():
        acc_ref[...] = jnp.zeros_like(acc_ref)

    x = x_ref[...]                                               # (TM, Din)
    # linear_1, split into the two SwiGLU halves (torch chunk(2, -1)).
    hx = jnp.dot(x, w1x_ref[...], preferred_element_type=jnp.float32) + b1x_ref[...]
    hg = jnp.dot(x, w1g_ref[...], preferred_element_type=jnp.float32) + b1g_ref[...]
    swiglu = (hg * jax.nn.sigmoid(hg)) * hx                      # SiLU(gate) * x, f32

    # Partial linear_2: cast activation to the weight dtype (bf16 fast path when
    # weights are bf16), accumulate in f32.
    acc_ref[...] += jnp.dot(swiglu.astype(w2_ref.dtype), w2_ref[...],
                            preferred_element_type=jnp.float32)

    @pl.when(k == pl.num_programs(1) - 1)
    def _():
        out_ref[...] = (acc_ref[...] + b2_ref[...]).astype(out_ref.dtype)


def cohere2_vision_projector(image_features, params, downsample_factor,
                             *, tok_block=256, i_block=512):
    d = downsample_factor
    shuffled = _pixel_shuffle(image_features, d)        # (B, W/d, H/d, Din)
    B, Wd, Hd, Din = shuffled.shape
    tokens = shuffled.reshape(-1, Din)                  # (N, Din)
    N = tokens.shape[0]

    w1, b1, w2, b2 = params["w1"], params["b1"], params["w2"], params["b2"]
    I = w1.shape[1]
    I_half = I // 2
    Dout = w2.shape[1]

    # Split linear_1 into the "x" half and the "gate" half (torch chunk(2, -1)).
    w1_x, w1_g = w1[:, :I_half], w1[:, I_half:]
    b1_x, b1_g = b1[:, :I_half], b1[:, I_half:]

    # Tile sizes (lane/sublane aligned).
    tm = min(_round_up(tok_block, 32), _round_up(N, 32))        # token rows per step
    ti = min(_round_up(i_block, 128), _round_up(I_half, 128))   # intermediate cols/step

    N_pad = _round_up(N, tm)
    Ih_pad = _round_up(I_half, ti)
    Dout_pad = _round_up(Dout, 128)                             # lane-dense output

    # Zero-pad (zero rows/cols contribute exactly zero to the result).
    tokens_p = jnp.pad(tokens, ((0, N_pad - N), (0, 0)))
    w1x_p = jnp.pad(w1_x, ((0, 0), (0, Ih_pad - I_half)))
    w1g_p = jnp.pad(w1_g, ((0, 0), (0, Ih_pad - I_half)))
    b1x_p = jnp.pad(b1_x, ((0, 0), (0, Ih_pad - I_half)))
    b1g_p = jnp.pad(b1_g, ((0, 0), (0, Ih_pad - I_half)))
    w2_p = jnp.pad(w2, ((0, Ih_pad - I_half), (0, Dout_pad - Dout)))
    b2_p = jnp.pad(b2, ((0, 0), (0, Dout_pad - Dout)))

    grid = (N_pad // tm, Ih_pad // ti)

    itemsize = jnp.dtype(tokens.dtype).itemsize
    cost = pl.CostEstimate(
        flops=2 * N_pad * Din * (2 * Ih_pad) + 2 * N_pad * Ih_pad * Dout_pad,
        transcendentals=N_pad * Ih_pad,
        bytes_accessed=int(
            tokens_p.size * itemsize
            + (w1x_p.size + w1g_p.size + b1x_p.size + b1g_p.size) * jnp.dtype(w1.dtype).itemsize
            + (w2_p.size + b2_p.size) * jnp.dtype(w2.dtype).itemsize
            + N_pad * Dout_pad * itemsize
        ),
    )

    out = pl.pallas_call(
        _projector_kernel,
        out_shape=jax.ShapeDtypeStruct((N_pad, Dout_pad), tokens.dtype),
        grid_spec=pltpu.PrefetchScalarGridSpec(
            num_scalar_prefetch=0,
            grid=grid,
            in_specs=[
                pl.BlockSpec((tm, Din),      lambda i, k: (i, 0)),   # token tile (resident over k)
                pl.BlockSpec((Din, ti),      lambda i, k: (0, k)),   # w1 "x" half tile
                pl.BlockSpec((Din, ti),      lambda i, k: (0, k)),   # w1 "gate" half tile
                pl.BlockSpec((1, ti),        lambda i, k: (0, k)),   # b1 "x" half tile
                pl.BlockSpec((1, ti),        lambda i, k: (0, k)),   # b1 "gate" half tile
                pl.BlockSpec((ti, Dout_pad), lambda i, k: (k, 0)),   # w2 tile
                pl.BlockSpec((1, Dout_pad),  lambda i, k: (0, 0)),   # b2
            ],
            out_specs=pl.BlockSpec((tm, Dout_pad), lambda i, k: (i, 0)),
            scratch_shapes=[pltpu.VMEM((tm, Dout_pad), jnp.float32)],
        ),
        compiler_params=pltpu.CompilerParams(
            dimension_semantics=("parallel", "arbitrary"),
            vmem_limit_bytes=64 * 1024 * 1024,
        ),
        cost_estimate=cost,
    )(tokens_p, w1x_p, w1g_p, b1x_p, b1g_p, w2_p, b2_p)

    out = out[:N, :Dout]
    return out.reshape(B, Wd, Hd, Dout)


def _reference(image_features, params, d):
    x = _pixel_shuffle(image_features, d)
    h = x @ params["w1"] + params["b1"][0]
    half = h.shape[-1] // 2
    x_part, gate = h[..., :half], h[..., half:]
    h2 = (gate * jax.nn.sigmoid(gate)) * x_part
    return h2 @ params["w2"] + params["b2"][0]


if __name__ == "__main__":
    # Small config consistent with the module:
    #   vision hidden = 32, downsample_factor = 2  -> linear_1 in = 32*4 = 128
    #   alignment_intermediate_size = 256          -> SwiGLU half = 128
    #   text hidden = 64
    #   batch = 2, seq = 16 (4x4 spatial -> 2x2 after downsample)
    batch, seq, vision_hidden = 2, 16, 32
    downsample = 2
    intermediate = 256
    text_hidden = 64
    din = vision_hidden * downsample * downsample

    key = jax.random.PRNGKey(0)
    k_in, k_w1, k_b1, k_w2, k_b2 = jax.random.split(key, 5)

    image_features = jax.random.normal(k_in, (batch, seq, vision_hidden), jnp.float32)
    params = {
        "w1": 0.02 * jax.random.normal(k_w1, (din, intermediate), jnp.float32),
        "b1": 0.02 * jax.random.normal(k_b1, (1, intermediate), jnp.float32),
        "w2": 0.02 * jax.random.normal(k_w2, (intermediate // 2, text_hidden), jnp.float32),
        "b2": 0.02 * jax.random.normal(k_b2, (1, text_hidden), jnp.float32),
    }

    out = cohere2_vision_projector(image_features, params, downsample)
    out = jax.block_until_ready(out)

    ref = jax.block_until_ready(_reference(image_features, params, downsample))
    np.testing.assert_allclose(np.asarray(out), np.asarray(ref), rtol=1e-5, atol=1e-5)

    print("KERNEL_OK")
</pallas_src>

<mosaic_0001>
module attributes {stable_mosaic.version = 11 : i64} {
  func.func @_projector_kernel(%arg0: i32, %arg1: i32, %arg2: memref<32x128xf32, #tpu.memory_space<vmem>>, %arg3: memref<128x128xf32, #tpu.memory_space<vmem>>, %arg4: memref<128x128xf32, #tpu.memory_space<vmem>>, %arg5: memref<1x128xf32, #tpu.memory_space<vmem>>, %arg6: memref<1x128xf32, #tpu.memory_space<vmem>>, %arg7: memref<128x128xf32, #tpu.memory_space<vmem>>, %arg8: memref<1x128xf32, #tpu.memory_space<vmem>>, %arg9: memref<32x128xf32, #tpu.memory_space<vmem>>, %arg10: memref<32x128xf32, #tpu.memory_space<vmem>>) attributes {dimension_semantics = [#tpu.dimension_semantics<parallel>, #tpu.dimension_semantics<arbitrary>], iteration_bounds = array<i64: 1, 1>, scalar_prefetch = 0 : i64, scratch_operands = 1 : i64, tpu.core_type = #tpu.core_type<tc>, window_params = [{transform_indices = @transform_0, window_bounds = array<i64: 32, 128>}, {transform_indices = @transform_1, window_bounds = array<i64: 128, 128>}, {transform_indices = @transform_2, window_bounds = array<i64: 128, 128>}, {transform_indices = @transform_3, window_bounds = array<i64: 1, 128>}, {transform_indices = @transform_4, window_bounds = array<i64: 1, 128>}, {transform_indices = @transform_5, window_bounds = array<i64: 128, 128>}, {pipeline_mode = #tpu.pipeline_mode<synchronous>, transform_indices = @transform_6, window_bounds = array<i64: 1, 128>}, {transform_indices = @transform_7, window_bounds = array<i64: 32, 128>}]} {
    %c0_i32 = arith.constant 0 : i32
    %0 = arith.cmpi eq, %arg1, %c0_i32 : i32
    %1 = arith.extui %0 : i1 to i32
    %c0_i32_0 = arith.constant 0 : i32
    %2 = arith.cmpi ne, %1, %c0_i32_0 : i32
    scf.if %2 {
      %cst_21 = arith.constant 0.000000e+00 : f32
      %29 = vector.broadcast %cst_21 : f32 to vector<32x128xf32>
      %c0_22 = arith.constant 0 : index
      %c0_23 = arith.constant 0 : index
      %30 = vector.load %arg10[%c0_22, %c0_23] : memref<32x128xf32, #tpu.memory_space<vmem>>, vector<32x128xf32>
      tpu.vector_store %arg10[%c0_22, %c0_23], %29 {strides = array<i32>} : memref<32x128xf32, #tpu.memory_space<vmem>>, vector<32x128xf32>,
    } else {
    }
    %c0 = arith.constant 0 : index
    %c0_1 = arith.constant 0 : index
    %3 = vector.load %arg2[%c0, %c0_1] : memref<32x128xf32, #tpu.memory_space<vmem>>, vector<32x128xf32>
    %c0_2 = arith.constant 0 : index
    %c0_3 = arith.constant 0 : index
    %4 = vector.load %arg3[%c0_2, %c0_3] : memref<128x128xf32, #tpu.memory_space<vmem>>, vector<128x128xf32>
    %cst = arith.constant dense<0.000000e+00> : vector<32x128xf32>
    %5 = tpu.matmul %3, %4, %cst {dimension_numbers = #tpu.dot_dimension_numbers<[1], [0], [0], [1], [0, 0, 1, 1], [], []>} : vector<32x128xf32>, vector<128x128xf32>, vector<32x128xf32> -> vector<32x128xf32>
    %c0_4 = arith.constant 0 : index
    %c0_5 = arith.constant 0 : index
    %6 = vector.load %arg5[%c0_4, %c0_5] : memref<1x128xf32, #tpu.memory_space<vmem>>, vector<1x128xf32>
    %7 = vector.broadcast %6 : vector<1x128xf32> to vector<32x128xf32>
    %8 = arith.addf %5, %7 : vector<32x128xf32>
    %c0_6 = arith.constant 0 : index
    %c0_7 = arith.constant 0 : index
    %9 = vector.load %arg4[%c0_6, %c0_7] : memref<128x128xf32, #tpu.memory_space<vmem>>, vector<128x128xf32>
    %cst_8 = arith.constant dense<0.000000e+00> : vector<32x128xf32>
    %10 = tpu.matmul %3, %9, %cst_8 {dimension_numbers = #tpu.dot_dimension_numbers<[1], [0], [0], [1], [0, 0, 1, 1], [], []>} : vector<32x128xf32>, vector<128x128xf32>, vector<32x128xf32> -> vector<32x128xf32>
    %c0_9 = arith.constant 0 : index
    %c0_10 = arith.constant 0 : index
    %11 = vector.load %arg6[%c0_9, %c0_10] : memref<1x128xf32, #tpu.memory_space<vmem>>, vector<1x128xf32>
    %12 = vector.broadcast %11 : vector<1x128xf32> to vector<32x128xf32>
    %13 = arith.addf %10, %12 : vector<32x128xf32>
    %14 = arith.negf %13 : vector<32x128xf32>
    %15 = math.exp %14 : vector<32x128xf32>
    %cst_11 = arith.constant 1.000000e+00 : f32
    %16 = vector.broadcast %cst_11 : f32 to vector<32x128xf32>
    %17 = arith.addf %16, %15 : vector<32x128xf32>
    %18 = arith.divf %16, %17 : vector<32x128xf32>
    %19 = arith.mulf %13, %18 : vector<32x128xf32>
    %20 = arith.mulf %19, %8 : vector<32x128xf32>
    %c0_12 = arith.constant 0 : index
    %c0_13 = arith.constant 0 : index
    %21 = vector.load %arg10[%c0_12, %c0_13] : memref<32x128xf32, #tpu.memory_space<vmem>>, vector<32x128xf32>
    %c0_14 = arith.constant 0 : index
    %c0_15 = arith.constant 0 : index
    %22 = vector.load %arg7[%c0_14, %c0_15] : memref<128x128xf32, #tpu.memory_space<vmem>>, vector<128x128xf32>
    %cst_16 = arith.constant dense<0.000000e+00> : vector<32x128xf32>
    %23 = tpu.matmul %20, %22, %cst_16 {dimension_numbers = #tpu.dot_dimension_numbers<[1], [0], [0], [1], [0, 0, 1, 1], [], []>} : vector<32x128xf32>, vector<128x128xf32>, vector<32x128xf32> -> vector<32x128xf32>
    %24 = arith.addf %21, %23 : vector<32x128xf32>
    %c0_17 = arith.constant 0 : index
    %c0_18 = arith.constant 0 : index
    %25 = vector.load %arg10[%c0_17, %c0_18] : memref<32x128xf32, #tpu.memory_space<vmem>>, vector<32x128xf32>
    tpu.vector_store %arg10[%c0_17, %c0_18], %24 {strides = array<i32>} : memref<32x128xf32, #tpu.memory_space<vmem>>, vector<32x128xf32>,
    %c0_i32_19 = arith.constant 0 : i32
    %26 = arith.cmpi eq, %arg1, %c0_i32_19 : i32
    %27 = arith.extui %26 : i1 to i32
    %c0_i32_20 = arith.constant 0 : i32
    %28 = arith.cmpi ne, %27, %c0_i32_20 : i32
    scf.if %28 {
      %c0_21 = arith.constant 0 : index
      %c0_22 = arith.constant 0 : index
      %29 = vector.load %arg10[%c0_21, %c0_22] : memref<32x128xf32, #tpu.memory_space<vmem>>, vector<32x128xf32>
      %c0_23 = arith.constant 0 : index
      %c0_24 = arith.constant 0 : index
      %30 = vector.load %arg8[%c0_23, %c0_24] : memref<1x128xf32, #tpu.memory_space<vmem>>, vector<1x128xf32>
      %31 = vector.broadcast %30 : vector<1x128xf32> to vector<32x128xf32>
      %32 = arith.addf %29, %31 : vector<32x128xf32>
      %c0_25 = arith.constant 0 : index
      %c0_26 = arith.constant 0 : index
      %33 = vector.load %arg9[%c0_25, %c0_26] : memref<32x128xf32, #tpu.memory_space<vmem>>, vector<32x128xf32>
      tpu.vector_store %arg9[%c0_25, %c0_26], %32 {strides = array<i32>} : memref<32x128xf32, #tpu.memory_space<vmem>>, vector<32x128xf32>,
    } else {
    }
    return
  }
  func.func @transform_0(%arg0: i32, %arg1: i32) -> (i32, i32) {
    %c0_i32 = arith.constant 0 : i32
    %c0_i32_0 = arith.constant 0 : i32
    return %arg0, %c0_i32 : i32, i32
  }
  func.func @transform_1(%arg0: i32, %arg1: i32) -> (i32, i32) {
    %c0_i32 = arith.constant 0 : i32
    %c0_i32_0 = arith.constant 0 : i32
    return %c0_i32, %arg1 : i32, i32
  }
  func.func @transform_2(%arg0: i32, %arg1: i32) -> (i32, i32) {
    %c0_i32 = arith.constant 0 : i32
    %c0_i32_0 = arith.constant 0 : i32
    return %c0_i32, %arg1 : i32, i32
  }
  func.func @transform_3(%arg0: i32, %arg1: i32) -> (i32, i32) {
    %c0_i32 = arith.constant 0 : i32
    %c0_i32_0 = arith.constant 0 : i32
    return %c0_i32, %arg1 : i32, i32
  }
  func.func @transform_4(%arg0: i32, %arg1: i32) -> (i32, i32) {
    %c0_i32 = arith.constant 0 : i32
    %c0_i32_0 = arith.constant 0 : i32
    return %c0_i32, %arg1 : i32, i32
  }
  func.func @transform_5(%arg0: i32, %arg1: i32) -> (i32, i32) {
    %c0_i32 = arith.constant 0 : i32
    %c0_i32_0 = arith.constant 0 : i32
    return %arg1, %c0_i32 : i32, i32
  }
  func.func @transform_6(%arg0: i32, %arg1: i32) -> (i32, i32) {
    %c0_i32 = arith.constant 0 : i32
    %c0_i32_0 = arith.constant 0 : i32
    %c0_i32_1 = arith.constant 0 : i32
    return %c0_i32, %c0_i32_0 : i32, i32
  }
  func.func @transform_7(%arg0: i32, %arg1: i32) -> (i32, i32) {
    %c0_i32 = arith.constant 0 : i32
    %c0_i32_0 = arith.constant 0 : i32
    return %arg0, %c0_i32 : i32, i32
  }
}

</mosaic_0001>

<llo_original>
// kernel: tpu_custom_call.1
$region0: #{tpu_custom_call.1}
  #allocation0 [shape = 'u32[]', space=smem, size = 0x4, offset = 0x4, fixed_abs, tag = 'smem constant byte address 0x4 - core index']
  #allocation1 [shape = 'u32[72,128]{1,0:T(1,128)}', space=vmem, size = 0x9000, scoped, tag = 'internal scratch']
  #allocation2 [shape = 'f32[32,128]{1,0:T(8,128)}', space=vmem, size = 0x4000, scoped, tag = 'scratch operand']
  %s0 = inlined_call_operand.hbm [shape: f32[32,128], index: 0, kind: input, shape index: {}]
  %s1 = inlined_call_operand.hbm [shape: f32[128,128], index: 1, kind: input, shape index: {}]
  %s2 = inlined_call_operand.hbm [shape: f32[128,128], index: 2, kind: input, shape index: {}]
  %s3 = inlined_call_operand.vmem [shape: f32[1,128], index: 3, kind: input, shape index: {}]
  %s4 = inlined_call_operand.vmem [shape: f32[1,128], index: 4, kind: input, shape index: {}]
  %s5 = inlined_call_operand.hbm [shape: f32[128,128], index: 5, kind: input, shape index: {}]
  %s6 = inlined_call_operand.vmem [shape: f32[1,128], index: 6, kind: input, shape index: {}]
  %s7 = inlined_call_operand.hbm [shape: f32[32,128], index: 7, kind: output, shape index: {}]
  %s8 = sld [smem:[#allocation0]]
  $region62: #{tpu_custom_call.1} parent=0
    _
  %s10 = ssub.s32 1, %s8
  %s11 = scalar_select 0, %s10, %s8
  $region1: #{tpu_custom_call.1} parent=0
    #allocation3 [shape = 'u8[16384]{0}', space=vmem, size = 0x4000, scoped, tag = 'input window, operand 0, single buffered']
    #allocation4 [shape = 's32[1]{0}', space=sflag, size = 0x4, scoped, tag = 'scoped memory for tpu_custom_call.1']
    #allocation5 [shape = 's32[1]{0}', space=sflag, size = 0x4, scoped, tag = 'scoped memory for tpu_custom_call.1']
    #allocation6 [shape = 'u8[65536]{0}', space=vmem, size = 0x10000, scoped, tag = 'input window, operand 1, single buffered']
    #allocation7 [shape = 's32[1]{0}', space=sflag, size = 0x4, scoped, tag = 'scoped memory for tpu_custom_call.1']
    #allocation8 [shape = 'u8[65536]{0}', space=vmem, size = 0x10000, scoped, tag = 'input window, operand 2, single buffered']
    #allocation9 [shape = 'u8[65536]{0}', space=vmem, size = 0x10000, scoped, tag = 'input window, operand 5, single buffered']
    #allocation10 [shape = 's32[1]{0}', space=sflag, size = 0x4, scoped, tag = 'scoped memory for tpu_custom_call.1']
    #allocation11 [shape = 'u8[16384]{0}', space=vmem, size = 0x4000, scoped, tag = 'output window, operand 0, single buffered']
    %12 = vsyncpa [#allocation4], 0
    %13 = vsyncpa [#allocation7], 0
    %14 = vsyncpa [#allocation10], 0
    %15 = vsyncpa [#allocation5], 0
    // Predicated region
    $region2: #{tpu_custom_call.1} parent=1 // pred_check
      _
    $region3: #{tpu_custom_call.1} parent=1 // pred_check_branch
      %17 = sbr.rel (0) target = $region5
    $region4: #{tpu_custom_call.1} parent=1 // pred_region
      %19 = vsyncadd [#allocation4], 0
      %s20 = sshll.u32 %s0, 4
      %s21 = int_to_ptr.hbm [resolvable:$true] %s20
      %s22 = sshll.u32 [#allocation3], 4
      %s23 = int_to_ptr.vmem [resolvable:$true] %s22
      %28 = dma.hbm_to_vmem [thread:$0]  %s21, 512, %s23, [#allocation4], 128, 128, 8
    $region5: #{tpu_custom_call.1} parent=1 // pred_fallthru
      _
    // Predicated region
    $region6: #{tpu_custom_call.1} parent=1 // pred_check
      _
    $region7: #{tpu_custom_call.1} parent=1 // pred_check_branch
      %30 = sbr.rel (0) target = $region9
    $region8: #{tpu_custom_call.1} parent=1 // pred_region
      %32 = vsyncadd [#allocation7], 0
      %s33 = sshll.u32 %s1, 4
      %s34 = int_to_ptr.hbm [resolvable:$true] %s33
      %s35 = sshll.u32 [#allocation6], 4
      %s36 = int_to_ptr.vmem [resolvable:$true] %s35
      %41 = dma.hbm_to_vmem [thread:$0]  %s34, 2048, %s36, [#allocation7], 128, 128, 8
    $region9: #{tpu_custom_call.1} parent=1 // pred_fallthru
      _
    // Predicated region
    $region10: #{tpu_custom_call.1} parent=1 // pred_check
      _
    $region11: #{tpu_custom_call.1} parent=1 // pred_check_branch
      %43 = sbr.rel (0) target = $region13
    $region12: #{tpu_custom_call.1} parent=1 // pred_region
      %45 = vsyncadd [#allocation7], 0
      %s46 = sshll.u32 %s2, 4
      %s47 = int_to_ptr.hbm [resolvable:$true] %s46
      %s48 = sshll.u32 [#allocation8], 4
      %s49 = int_to_ptr.vmem [resolvable:$true] %s48
      %54 = dma.hbm_to_vmem [thread:$0]  %s47, 2048, %s49, [#allocation7], 128, 128, 8
    $region13: #{tpu_custom_call.1} parent=1 // pred_fallthru
      _
    // Predicated region
    $region14: #{tpu_custom_call.1} parent=1 // pred_check
      _
    $region15: #{tpu_custom_call.1} parent=1 // pred_check_branch
      %56 = sbr.rel (0) target = $region17
    $region16: #{tpu_custom_call.1} parent=1 // pred_region
      _
    $region17: #{tpu_custom_call.1} parent=1 // pred_fallthru
      _
    // Predicated region
    $region18: #{tpu_custom_call.1} parent=1 // pred_check
      _
    $region19: #{tpu_custom_call.1} parent=1 // pred_check_branch
      %58 = sbr.rel (0) target = $region21
    $region20: #{tpu_custom_call.1} parent=1 // pred_region
      _
    $region21: #{tpu_custom_call.1} parent=1 // pred_fallthru
      _
    // Predicated region
    $region22: #{tpu_custom_call.1} parent=1 // pred_check
      _
    $region23: #{tpu_custom_call.1} parent=1 // pred_check_branch
      %60 = sbr.rel (0) target = $region25
    $region24: #{tpu_custom_call.1} parent=1 // pred_region
      %62 = vsyncadd [#allocation10], 0
      %s63 = sshll.u32 %s5, 4
      %s64 = int_to_ptr.hbm [resolvable:$true] %s63
      %s65 = sshll.u32 [#allocation9], 4
      %s66 = int_to_ptr.vmem [resolvable:$true] %s65
      %71 = dma.hbm_to_vmem [thread:$0]  %s64, 2048, %s66, [#allocation10], 128, 128, 8
    $region25: #{tpu_custom_call.1} parent=1 // pred_fallthru
      _
    // Predicated region
    $region26: #{tpu_custom_call.1} parent=1 // pred_check
      _
    $region27: #{tpu_custom_call.1} parent=1 // pred_check_branch
      %73 = sbr.rel (0) target = $region29
    $region28: #{tpu_custom_call.1} parent=1 // pred_region
      _
    $region29: #{tpu_custom_call.1} parent=1 // pred_fallthru
      _
    // Predicated region
    $region30: #{tpu_custom_call.1} parent=1 // pred_check
      _
    $region31: #{tpu_custom_call.1} parent=1 // pred_check_branch
      %75 = sbr.rel (0) target = $region33
    $region32: #{tpu_custom_call.1} parent=1 // pred_region
      %77 = dma.done [#allocation4], 512
    $region33: #{tpu_custom_call.1} parent=1 // pred_fallthru
      _
    // Predicated region
    $region34: #{tpu_custom_call.1} parent=1 // pred_check
      _
    $region35: #{tpu_custom_call.1} parent=1 // pred_check_branch
      %79 = sbr.rel (0) target = $region37
    $region36: #{tpu_custom_call.1} parent=1 // pred_region
      %81 = dma.done [#allocation7], 2048
    $region37: #{tpu_custom_call.1} parent=1 // pred_fallthru
      _
    // Predicated region
    $region38: #{tpu_custom_call.1} parent=1 // pred_check
      _
    $region39: #{tpu_custom_call.1} parent=1 // pred_check_branch
      %83 = sbr.rel (0) target = $region41
    $region40: #{tpu_custom_call.1} parent=1 // pred_region
      %85 = dma.done [#allocation7], 2048
    $region41: #{tpu_custom_call.1} parent=1 // pred_fallthru
      _
    // Predicated region
    $region42: #{tpu_custom_call.1} parent=1 // pred_check
      _
    $region43: #{tpu_custom_call.1} parent=1 // pred_check_branch
      %87 = sbr.rel (0) target = $region45
    $region44: #{tpu_custom_call.1} parent=1 // pred_region
      %89 = dma.done [#allocation10], 2048
    $region45: #{tpu_custom_call.1} parent=1 // pred_fallthru
      _
    %p90 = scmp.eq.s32.totalorder 0, 0
    // Predicated region
    $region46: #{tpu_custom_call.1} parent=1 // pred_check
      %p91 = pneg %p90
    $region47: #{tpu_custom_call.1} parent=1 // pred_check_branch
      %93 = sbr.rel (%p91) target = $region49
    $region48: #{tpu_custom_call.1} parent=1 // pred_region
      %94 = vst [vmem:[#allocation2] sm:$0xff] 0.0
      %95 = vst [vmem:[#allocation2 + $0x8] sm:$0xff] 0.0
      %96 = vst [vmem:[#allocation2 + $0x10] sm:$0xff] 0.0
      %97 = vst [vmem:[#allocation2 + $0x18] sm:$0xff] 0.0
    $region49: #{tpu_custom_call.1} parent=1 // pred_fallthru
      _
    %v98 = vld [vmem:[#allocation3] sm:$0xff]
    %v99 = vld [vmem:[#allocation3 + $0x8] sm:$0xff]
    %v100 = vld [vmem:[#allocation3 + $0x10] sm:$0xff]
    %v101 = vld [vmem:[#allocation3 + $0x18] sm:$0xff]
    %v102 = vld [vmem:[#allocation6] sm:$0xff]
    %v103 = vld [vmem:[#allocation6 + $0x8] sm:$0xff]
    %v104 = vld [vmem:[#allocation6 + $0x10] sm:$0xff]
    %v105 = vld [vmem:[#allocation6 + $0x18] sm:$0xff]
    %v106 = vld [vmem:[#allocation6 + $0x20] sm:$0xff]
    %v107 = vld [vmem:[#allocation6 + $0x28] sm:$0xff]
    %v108 = vld [vmem:[#allocation6 + $0x30] sm:$0xff]
    %v109 = vld [vmem:[#allocation6 + $0x38] sm:$0xff]
    %v110 = vld [vmem:[#allocation6 + $0x40] sm:$0xff]
    %v111 = vld [vmem:[#allocation6 + $0x48] sm:$0xff]
    %v112 = vld [vmem:[#allocation6 + $0x50] sm:$0xff]
    %v113 = vld [vmem:[#allocation6 + $0x58] sm:$0xff]
    %v114 = vld [vmem:[#allocation6 + $0x60] sm:$0xff]
    %v115 = vld [vmem:[#allocation6 + $0x68] sm:$0xff]
    %v116 = vld [vmem:[#allocation6 + $0x70] sm:$0xff]
    %v117 = vld [vmem:[#allocation6 + $0x78] sm:$0xff]
    %v118 = vld [vmem:[%s3] sm:$0x1]
    %v120 = vperm.slane %v118, 0
    %122 = vmatpush.msra.mxu0 %v117
    %123 = vmatpush.msra.mxu0 %v116
    %124 = vmatpush.msra.mxu0 %v115
    %125 = vmatpush.msra.mxu0 %v114
    %126 = vmatpush.msra.mxu0 %v113
    %127 = vmatpush.msra.mxu0 %v112
    %128 = vmatpush.msra.mxu0 %v111
    %129 = vmatpush.msra.mxu0 %v110
    %130 = vmatpush.msra.mxu0 %v109
    %131 = vmatpush.msra.mxu0 %v108
    %132 = vmatpush.msra.mxu0 %v107
    %133 = vmatpush.msra.mxu0 %v106
    %134 = vmatpush.msra.mxu0 %v105
    %135 = vmatpush.msra.mxu0 %v104
    %136 = vmatpush.msra.mxu0 %v103
    %137 = vmatpush.msra.mxu0 %v102
    %138 = vmatmul.f32.gmra.mxu0 %v98
    %v139 = vpop.f32.mrf.mxu0
    %v140 = vadd.f32 %v120, %v139
    %141 = vmatmul.f32.gmra.mxu0 %v99
    %v142 = vpop.f32.mrf.mxu0
    %v143 = vadd.f32 %v120, %v142
    %144 = vmatmul.f32.gmra.mxu0 %v100
    %v145 = vpop.f32.mrf.mxu0
    %v146 = vadd.f32 %v120, %v145
    %147 = vmatmul.f32.gmra.mxu0 %v101
    %v148 = vpop.f32.mrf.mxu0
    %v149 = vadd.f32 %v120, %v148
    %150 = vdwg.mxu0
    %v151 = vld [vmem:[#allocation8] sm:$0xff]
    %v152 = vld [vmem:[#allocation8 + $0x8] sm:$0xff]
    %v153 = vld [vmem:[#allocation8 + $0x10] sm:$0xff]
    %v154 = vld [vmem:[#allocation8 + $0x18] sm:$0xff]
    %v155 = vld [vmem:[#allocation8 + $0x20] sm:$0xff]
    %v156 = vld [vmem:[#allocation8 + $0x28] sm:$0xff]
    %v157 = vld [vmem:[#allocation8 + $0x30] sm:$0xff]
    %v158 = vld [vmem:[#allocation8 + $0x38] sm:$0xff]
    %v159 = vld [vmem:[#allocation8 + $0x40] sm:$0xff]
    %v160 = vld [vmem:[#allocation8 + $0x48] sm:$0xff]
    %v161 = vld [vmem:[#allocation8 + $0x50] sm:$0xff]
    %v162 = vld [vmem:[#allocation8 + $0x58] sm:$0xff]
    %v163 = vld [vmem:[#allocation8 + $0x60] sm:$0xff]
    %v164 = vld [vmem:[#allocation8 + $0x68] sm:$0xff]
    %v165 = vld [vmem:[#allocation8 + $0x70] sm:$0xff]
    %v166 = vld [vmem:[#allocation8 + $0x78] sm:$0xff]
    %v167 = vld [vmem:[%s4] sm:$0x1]
    %v169 = vperm.slane %v167, 0
    %171 = vmatpush.msra.mxu0 %v166
    %172 = vmatpush.msra.mxu0 %v165
    %173 = vmatpush.msra.mxu0 %v164
    %174 = vmatpush.msra.mxu0 %v163
    %175 = vmatpush.msra.mxu0 %v162
    %176 = vmatpush.msra.mxu0 %v161
    %177 = vmatpush.msra.mxu0 %v160
    %178 = vmatpush.msra.mxu0 %v159
    %179 = vmatpush.msra.mxu0 %v158
    %180 = vmatpush.msra.mxu0 %v157
    %181 = vmatpush.msra.mxu0 %v156
    %182 = vmatpush.msra.mxu0 %v155
    %183 = vmatpush.msra.mxu0 %v154
    %184 = vmatpush.msra.mxu0 %v153
    %185 = vmatpush.msra.mxu0 %v152
    %186 = vmatpush.msra.mxu0 %v151
    %187 = vmatmul.f32.gmra.mxu0 %v98
    %v188 = vpop.f32.mrf.mxu0
    %v189 = vadd.f32 %v169, %v188
    %190 = vmatmul.f32.gmra.mxu0 %v99
    %v191 = vpop.f32.mrf.mxu0
    %v192 = vadd.f32 %v169, %v191
    %193 = vmatmul.f32.gmra.mxu0 %v100
    %v194 = vpop.f32.mrf.mxu0
    %v195 = vadd.f32 %v169, %v194
    %196 = vmatmul.f32.gmra.mxu0 %v101
    %v197 = vpop.f32.mrf.mxu0
    %v198 = vadd.f32 %v169, %v197
    %199 = vdwg.mxu0
    %v200 = vxor.u32 %v189, 2147483648
    %v201 = vxor.u32 %v192, 2147483648
    %v202 = vxor.u32 %v195, 2147483648
    %v203 = vxor.u32 %v198, 2147483648
    %v204 = vmul.f32 %v200, 1.442695
    %v205 = vpow.pop %v204
    %v206 = vmul.f32 %v201, 1.442695
    %v207 = vpow.pop %v206
    %v208 = vmul.f32 %v202, 1.442695
    %v209 = vpow.pop %v208
    %v210 = vmul.f32 %v203, 1.442695
    %v211 = vpow.pop %v210
    %v212 = vadd.f32 %v205, 1.0
    %v213 = vadd.f32 %v207, 1.0
    %v214 = vadd.f32 %v209, 1.0
    %v215 = vadd.f32 %v211, 1.0
    %v216 = vrcp.pop %v212
    %v217 = vmul.f32 %v212, %v216
    %v218 = vsub.f32 1.0, %v217
    %v219 = vmul.f32 %v216, %v218
    %v220 = vadd.f32 %v216, %v219
    %vm221 = vweird.f32 %v212
    %vm222 = vweird.f32 %v216
    %vm223 = vmor %vm221, %vm222
    %v224 = vsel %vm223, %v216, %v220
    %v225 = vand.u32 2147483647, %v212
    %vm226 = vcmp.eq.f32.partialorder %v225, 8.507059e+37
    %v227 = vand.u32 %v212, 2147483648
    %v228 = vor.u32 1.1754944e-38, %v227
    %v229 = vsel %vm226, %v228, %v224
    %v230 = vmul.f32 1.0, %v229
    %v231 = vrcp.pop %v213
    %v232 = vmul.f32 %v213, %v231
    %v233 = vsub.f32 1.0, %v232
    %v234 = vmul.f32 %v231, %v233
    %v235 = vadd.f32 %v231, %v234
    %vm236 = vweird.f32 %v213
    %vm237 = vweird.f32 %v231
    %vm238 = vmor %vm236, %vm237
    %v239 = vsel %vm238, %v231, %v235
    %v240 = vand.u32 2147483647, %v213
    %vm241 = vcmp.eq.f32.partialorder %v240, 8.507059e+37
    %v242 = vand.u32 %v213, 2147483648
    %v243 = vor.u32 1.1754944e-38, %v242
    %v244 = vsel %vm241, %v243, %v239
    %v245 = vmul.f32 1.0, %v244
    %v246 = vrcp.pop %v214
    %v247 = vmul.f32 %v214, %v246
    %v248 = vsub.f32 1.0, %v247
    %v249 = vmul.f32 %v246, %v248
    %v250 = vadd.f32 %v246, %v249
    %vm251 = vweird.f32 %v214
    %vm252 = vweird.f32 %v246
    %vm253 = vmor %vm251, %vm252
    %v254 = vsel %vm253, %v246, %v250
    %v255 = vand.u32 2147483647, %v214
    %vm256 = vcmp.eq.f32.partialorder %v255, 8.507059e+37
    %v257 = vand.u32 %v214, 2147483648
    %v258 = vor.u32 1.1754944e-38, %v257
    %v259 = vsel %vm256, %v258, %v254
    %v260 = vmul.f32 1.0, %v259
    %v261 = vrcp.pop %v215
    %v262 = vmul.f32 %v215, %v261
    %v263 = vsub.f32 1.0, %v262
    %v264 = vmul.f32 %v261, %v263
    %v265 = vadd.f32 %v261, %v264
    %vm266 = vweird.f32 %v215
    %vm267 = vweird.f32 %v261
    %vm268 = vmor %vm266, %vm267
    %v269 = vsel %vm268, %v261, %v265
    %v270 = vand.u32 2147483647, %v215
    %vm271 = vcmp.eq.f32.partialorder %v270, 8.507059e+37
    %v272 = vand.u32 %v215, 2147483648
    %v273 = vor.u32 1.1754944e-38, %v272
    %v274 = vsel %vm271, %v273, %v269
    %v275 = vmul.f32 1.0, %v274
    %v276 = vmul.f32 %v189, %v230
    %v277 = vmul.f32 %v192, %v245
    %v278 = vmul.f32 %v195, %v260
    %v279 = vmul.f32 %v198, %v275
    %v280 = vmul.f32 %v276, %v140
    %v281 = vmul.f32 %v277, %v143
    %v282 = vmul.f32 %v278, %v146
    %v283 = vmul.f32 %v279, %v149
    %v284 = vld [vmem:[#allocation2] sm:$0xff]
    %v285 = vld [vmem:[#allocation2 + $0x8] sm:$0xff]
    %v286 = vld [vmem:[#allocation2 + $0x10] sm:$0xff]
    %v287 = vld [vmem:[#allocation2 + $0x18] sm:$0xff]
    %v288 = vld [vmem:[#allocation9] sm:$0xff]
    %v289 = vld [vmem:[#allocation9 + $0x8] sm:$0xff]
    %v290 = vld [vmem:[#allocation9 + $0x10] sm:$0xff]
    %v291 = vld [vmem:[#allocation9 + $0x18] sm:$0xff]
    %v292 = vld [vmem:[#allocation9 + $0x20] sm:$0xff]
    %v293 = vld [vmem:[#allocation9 + $0x28] sm:$0xff]
    %v294 = vld [vmem:[#allocation9 + $0x30] sm:$0xff]
    %v295 = vld [vmem:[#allocation9 + $0x38] sm:$0xff]
    %v296 = vld [vmem:[#allocation9 + $0x40] sm:$0xff]
    %v297 = vld [vmem:[#allocation9 + $0x48] sm:$0xff]
    %v298 = vld [vmem:[#allocation9 + $0x50] sm:$0xff]
    %v299 = vld [vmem:[#allocation9 + $0x58] sm:$0xff]
    %v300 = vld [vmem:[#allocation9 + $0x60] sm:$0xff]
    %v301 = vld [vmem:[#allocation9 + $0x68] sm:$0xff]
    %v302 = vld [vmem:[#allocation9 + $0x70] sm:$0xff]
    %v303 = vld [vmem:[#allocation9 + $0x78] sm:$0xff]
    %304 = vmatpush.msra.mxu0 %v303
    %305 = vmatpush.msra.mxu0 %v302
    %306 = vmatpush.msra.mxu0 %v301
    %307 = vmatpush.msra.mxu0 %v300
    %308 = vmatpush.msra.mxu0 %v299
    %309 = vmatpush.msra.mxu0 %v298
    %310 = vmatpush.msra.mxu0 %v297
    %311 = vmatpush.msra.mxu0 %v296
    %312 = vmatpush.msra.mxu0 %v295
    %313 = vmatpush.msra.mxu0 %v294
    %314 = vmatpush.msra.mxu0 %v293
    %315 = vmatpush.msra.mxu0 %v292
    %316 = vmatpush.msra.mxu0 %v291
    %317 = vmatpush.msra.mxu0 %v290
    %318 = vmatpush.msra.mxu0 %v289
    %319 = vmatpush.msra.mxu0 %v288
    %320 = vmatmul.f32.gmra.mxu0 %v280
    %v321 = vpop.f32.mrf.mxu0
    %v322 = vadd.f32 0.0, %v321
    %323 = vmatmul.f32.gmra.mxu0 %v281
    %v324 = vpop.f32.mrf.mxu0
    %v325 = vadd.f32 0.0, %v324
    %326 = vmatmul.f32.gmra.mxu0 %v282
    %v327 = vpop.f32.mrf.mxu0
    %v328 = vadd.f32 0.0, %v327
    %329 = vmatmul.f32.gmra.mxu0 %v283
    %v330 = vpop.f32.mrf.mxu0
    %v331 = vadd.f32 0.0, %v330
    %332 = vdwg.mxu0
    %v333 = vadd.f32 %v284, %v322
    %v334 = vadd.f32 %v285, %v325
    %v335 = vadd.f32 %v286, %v328
    %v336 = vadd.f32 %v287, %v331
    %337 = vst [vmem:[#allocation2] sm:$0xff] %v333
    %338 = vst [vmem:[#allocation2 + $0x8] sm:$0xff] %v334
    %339 = vst [vmem:[#allocation2 + $0x10] sm:$0xff] %v335
    %340 = vst [vmem:[#allocation2 + $0x18] sm:$0xff] %v336
    // Predicated region
    $region50: #{tpu_custom_call.1} parent=1 // pred_check
      %p341 = pneg %p90
    $region51: #{tpu_custom_call.1} parent=1 // pred_check_branch
      %343 = sbr.rel (%p341) target = $region53
    $region52: #{tpu_custom_call.1} parent=1 // pred_region
      %v344 = vld [vmem:[#allocation2] sm:$0xff]
      %v345 = vld [vmem:[#allocation2 + $0x8] sm:$0xff]
      %v346 = vld [vmem:[#allocation2 + $0x10] sm:$0xff]
      %v347 = vld [vmem:[#allocation2 + $0x18] sm:$0xff]
      %v348 = vld [vmem:[%s6] sm:$0x1]
      %v350 = vperm.slane %v348, 0
      %v352 = vadd.f32 %v344, %v350
      %v353 = vadd.f32 %v345, %v350
      %v354 = vadd.f32 %v346, %v350
      %v355 = vadd.f32 %v347, %v350
      %356 = vst [vmem:[#allocation11] sm:$0xff] %v352
      %357 = vst [vmem:[#allocation11 + $0x8] sm:$0xff] %v353
      %358 = vst [vmem:[#allocation11 + $0x10] sm:$0xff] %v354
      %359 = vst [vmem:[#allocation11 + $0x18] sm:$0xff] %v355
    $region53: #{tpu_custom_call.1} parent=1 // pred_fallthru
      _
    // Predicated region
    $region54: #{tpu_custom_call.1} parent=1 // pred_check
      _
    $region55: #{tpu_custom_call.1} parent=1 // pred_check_branch
      %361 = sbr.rel (0) target = $region57
    $region56: #{tpu_custom_call.1} parent=1 // pred_region
      %363 = vsyncadd [#allocation5], 0
      %s364 = sshll.u32 [#allocation11], 4
      %s365 = int_to_ptr.vmem [resolvable:$true] %s364
      %s366 = sshll.u32 %s7, 4
      %s367 = int_to_ptr.hbm [resolvable:$true] %s366
      %372 = dma.vmem_to_hbm [thread:$0]  %s365, 512, %s367, [#allocation5], 128, 128, 8
    $region57: #{tpu_custom_call.1} parent=1 // pred_fallthru
      _
    // Predicated region
    $region58: #{tpu_custom_call.1} parent=1 // pred_check
      _
    $region59: #{tpu_custom_call.1} parent=1 // pred_check_branch
      %374 = sbr.rel (0) target = $region61
    $region60: #{tpu_custom_call.1} parent=1 // pred_region
      %376 = dma.done [#allocation5], 512
    $region61: #{tpu_custom_call.1} parent=1 // pred_fallthru
      _
    %377 = vsyncpa [#allocation4], 1
    %378 = vsyncpa [#allocation7], 1
    %379 = vsyncpa [#allocation10], 1
    %380 = vsyncpa [#allocation5], 1

</llo_original>
